<compile_context>
chip_gen: v5e
topology: v5e:2x2
jax: 0.10.0
libtpu: 0.0.40
codegen_flags: <defaults>
</compile_context>

<pallas_src>
import math

import jax
import jax.numpy as jnp
from jax.experimental import pallas as pl
from jax.experimental.pallas import tpu as pltpu


def _round_up(v, m):
    return (v + m - 1) // m * m


def _pick_tile(dim, cap=512):
    """Largest power-of-two tile (128..cap) dividing `dim` (dim % 128 == 0)."""
    t = cap
    while t > 128:
        if dim % t == 0:
            return t
        t //= 2
    return 128


# ---------------- stage 1: XW = X @ W (batch folded into M) ----------------
def _xw_kernel(x_ref, w_ref, o_ref):
    # x_ref: (tm, F_in_p)  w_ref: (F_in_p, F_out_p)  o_ref: (tm, F_out_p)
    o_ref[...] = jnp.dot(x_ref[...], w_ref[...],
                         preferred_element_type=jnp.float32).astype(o_ref.dtype)


# ------------- stage 2: out[b] = A @ XW[b] + bias (tiled reduction) ---------
def _agg_kernel(a_ref, xw_ref, bias_ref, o_ref, acc_ref):
    # a_ref: (tm, tk)  xw_ref: (tk, F_out_p)  bias_ref: (1, F_out_p)
    # o_ref: (tm, F_out_p)  acc_ref: (tm, F_out_p) f32 scratch
    k = pl.program_id(2)

    @pl.when(k == 0)
    def _():
        acc_ref[...] = jnp.zeros_like(acc_ref)

    acc_ref[...] += jnp.dot(a_ref[...], xw_ref[...],
                            preferred_element_type=jnp.float32)

    @pl.when(k == pl.num_programs(2) - 1)
    def _():
        o_ref[...] = (acc_ref[...] + bias_ref[...]).astype(o_ref.dtype)


def graph_convolution(x, A, weight, bias, *, compute_dtype=None, tile_cap=512):
    """out[b] = A @ (x[b] @ weight) + bias.  x:(B,N,Fi) A:(N,N) W:(Fi,Fo) b:(Fo,)."""
    B, N, F_in = x.shape
    F_out = weight.shape[1]
    out_dtype = x.dtype

    if compute_dtype is not None:   # e.g. jnp.bfloat16 on v5e/v6e/v7x (f32 accumulate)
        x = x.astype(compute_dtype)
        A = A.astype(compute_dtype)
        weight = weight.astype(compute_dtype)
    bias_f32 = bias.astype(jnp.float32)

    # Pad to lane-dense shapes. Zero padding is exact: padded rows/cols of A and
    # x contribute 0, padded features are sliced off at the end.
    N_p = _round_up(N, 128)
    F_in_p = _round_up(F_in, 128)
    F_out_p = _round_up(F_out, 128)

    x_p = jnp.pad(x, ((0, 0), (0, N_p - N), (0, F_in_p - F_in)))
    A_p = jnp.pad(A, ((0, N_p - N), (0, N_p - N)))
    w_p = jnp.pad(weight, ((0, F_in_p - F_in), (0, F_out_p - F_out)))
    b_p = jnp.pad(bias_f32, (0, F_out_p - F_out)).reshape(1, F_out_p)

    # ---------------- stage 1 ----------------
    M = B * N_p
    tm1 = _pick_tile(M, tile_cap)
    x_flat = x_p.reshape(M, F_in_p)
    xw_dtype = x_p.dtype

    xw = pl.pallas_call(
        _xw_kernel,
        out_shape=jax.ShapeDtypeStruct((M, F_out_p), xw_dtype),
        grid_spec=pltpu.PrefetchScalarGridSpec(
            num_scalar_prefetch=0,
            grid=(M // tm1,),
            in_specs=[
                pl.BlockSpec((tm1, F_in_p), lambda i: (i, 0)),
                pl.BlockSpec((F_in_p, F_out_p), lambda i: (0, 0)),
            ],
            out_specs=pl.BlockSpec((tm1, F_out_p), lambda i: (i, 0)),
        ),
        compiler_params=pltpu.CompilerParams(
            dimension_semantics=("parallel",),
            vmem_limit_bytes=32 * 1024 * 1024,
        ),
        cost_estimate=pl.CostEstimate(
            flops=2 * M * F_in_p * F_out_p,
            transcendentals=0,
            bytes_accessed=(x_flat.size * x_flat.dtype.itemsize
                            + w_p.size * w_p.dtype.itemsize
                            + M * F_out_p * jnp.dtype(xw_dtype).itemsize),
        ),
    )(x_flat, w_p)

    xw = xw.reshape(B, N_p, F_out_p)

    # ---------------- stage 2 ----------------
    tm = _pick_tile(N_p, tile_cap)
    tk = _pick_tile(N_p, tile_cap)
    grid = (B, N_p // tm, N_p // tk)   # reduction axis (k over A columns) last

    out_p = pl.pallas_call(
        _agg_kernel,
        out_shape=jax.ShapeDtypeStruct((B, N_p, F_out_p), out_dtype),
        grid_spec=pltpu.PrefetchScalarGridSpec(
            num_scalar_prefetch=0,
            grid=grid,
            in_specs=[
                pl.BlockSpec((tm, tk), lambda b, i, k: (i, k)),
                pl.BlockSpec((pl.Squeezed(), tk, F_out_p),
                             lambda b, i, k: (b, k, 0)),
                pl.BlockSpec((1, F_out_p), lambda b, i, k: (0, 0)),
            ],
            out_specs=pl.BlockSpec((pl.Squeezed(), tm, F_out_p),
                                   lambda b, i, k: (b, i, 0)),
            scratch_shapes=[pltpu.VMEM((tm, F_out_p), jnp.float32)],
        ),
        compiler_params=pltpu.CompilerParams(
            dimension_semantics=("parallel", "parallel", "arbitrary"),
            vmem_limit_bytes=32 * 1024 * 1024,
        ),
        cost_estimate=pl.CostEstimate(
            flops=2 * B * N_p * N_p * F_out_p,
            transcendentals=0,
            bytes_accessed=(B * A_p.size * A_p.dtype.itemsize
                            + xw.size * xw.dtype.itemsize
                            + B * N_p * F_out_p * jnp.dtype(out_dtype).itemsize),
        ),
    )(A_p, xw, b_p)

    return out_p[:, :N, :F_out]


def _reference(x, A, weight, bias):
    hi = jax.lax.Precision.HIGHEST
    xw = jnp.einsum('ijk,kl->ijl', x, weight, precision=hi)
    return jnp.einsum('ij,kjl->kil', A, xw, precision=hi) + bias


if __name__ == "__main__":
    # Small shapes consistent with the module's forward.
    B, N, F_in, F_out = 2, 16, 32, 32

    key = jax.random.PRNGKey(0)
    kx, ka, kw, kb = jax.random.split(key, 4)

    x = jax.random.normal(kx, (B, N, F_in), dtype=jnp.float32)
    A = jax.random.normal(ka, (N, N), dtype=jnp.float32)

    # Deterministic parameter init mirroring init_parameters():
    # uniform(-stdv, stdv) with stdv = 1 / sqrt(output_size)
    stdv = 1.0 / math.sqrt(F_out)
    weight = jax.random.uniform(kw, (F_in, F_out), dtype=jnp.float32,
                                minval=-stdv, maxval=stdv)
    bias = jax.random.uniform(kb, (F_out,), dtype=jnp.float32,
                              minval=-stdv, maxval=stdv)

    out = jax.block_until_ready(graph_convolution(x, A, weight, bias))
    ref = _reference(x, A, weight, bias)
    assert out.shape == (B, N, F_out)
    assert jnp.allclose(out, ref, atol=1e-5, rtol=1e-5), \
        float(jnp.max(jnp.abs(out - ref)))

    # Exercise padding + the multi-tile reduction path (N_p=384 -> 3x3 A tiles).
    B2, N2, Fi2, Fo2 = 3, 300, 48, 40
    k2 = jax.random.split(jax.random.PRNGKey(0), 4)
    x2 = jax.random.normal(k2[0], (B2, N2, Fi2), dtype=jnp.float32)
    A2 = jax.random.normal(k2[1], (N2, N2), dtype=jnp.float32)
    w2 = jax.random.uniform(k2[2], (Fi2, Fo2), dtype=jnp.float32,
                            minval=-0.15, maxval=0.15)
    b2 = jax.random.uniform(k2[3], (Fo2,), dtype=jnp.float32,
                            minval=-0.15, maxval=0.15)
    out2 = jax.block_until_ready(graph_convolution(x2, A2, w2, b2))
    ref2 = _reference(x2, A2, w2, b2)
    assert out2.shape == (B2, N2, Fo2)
    assert jnp.allclose(out2, ref2, atol=2e-3, rtol=2e-3), \
        float(jnp.max(jnp.abs(out2 - ref2)))

    # bf16-in / f32-acc path (recommended for MXU throughput on v5e/v6e/v7x).
    out_bf16 = jax.block_until_ready(
        graph_convolution(x, A, weight, bias, compute_dtype=jnp.bfloat16))
    assert out_bf16.shape == (B, N, F_out)
    assert jnp.allclose(out_bf16, ref, atol=1e-1, rtol=1e-1)

    print("KERNEL_OK")
</pallas_src>

<mosaic_0001>
module attributes {stable_mosaic.version = 11 : i64} {
  func.func @_xw_kernel(%arg0: i32, %arg1: memref<256x128xf32, #tpu.memory_space<vmem>>, %arg2: memref<128x128xf32, #tpu.memory_space<vmem>>, %arg3: memref<256x128xf32, #tpu.memory_space<vmem>>) attributes {dimension_semantics = [#tpu.dimension_semantics<parallel>], iteration_bounds = array<i64: 1>, scalar_prefetch = 0 : i64, scratch_operands = 0 : i64, tpu.core_type = #tpu.core_type<tc>, window_params = [{transform_indices = @transform_0, window_bounds = array<i64: 256, 128>}, {pipeline_mode = #tpu.pipeline_mode<synchronous>, transform_indices = @transform_1, window_bounds = array<i64: 128, 128>}, {transform_indices = @transform_2, window_bounds = array<i64: 256, 128>}]} {
    %c0 = arith.constant 0 : index
    %c0_0 = arith.constant 0 : index
    %0 = vector.load %arg1[%c0, %c0_0] : memref<256x128xf32, #tpu.memory_space<vmem>>, vector<256x128xf32>
    %c0_1 = arith.constant 0 : index
    %c0_2 = arith.constant 0 : index
    %1 = vector.load %arg2[%c0_1, %c0_2] : memref<128x128xf32, #tpu.memory_space<vmem>>, vector<128x128xf32>
    %cst = arith.constant dense<0.000000e+00> : vector<256x128xf32>
    %2 = tpu.matmul %0, %1, %cst {dimension_numbers = #tpu.dot_dimension_numbers<[1], [0], [0], [1], [0, 0, 1, 1], [], []>} : vector<256x128xf32>, vector<128x128xf32>, vector<256x128xf32> -> vector<256x128xf32>
    %c0_3 = arith.constant 0 : index
    %c0_4 = arith.constant 0 : index
    %3 = vector.load %arg3[%c0_3, %c0_4] : memref<256x128xf32, #tpu.memory_space<vmem>>, vector<256x128xf32>
    tpu.vector_store %arg3[%c0_3, %c0_4], %2 {strides = array<i32>} : memref<256x128xf32, #tpu.memory_space<vmem>>, vector<256x128xf32>,
    return
  }
  func.func @transform_0(%arg0: i32) -> (i32, i32) {
    %c0_i32 = arith.constant 0 : i32
    %c0_i32_0 = arith.constant 0 : i32
    return %arg0, %c0_i32 : i32, i32
  }
  func.func @transform_1(%arg0: i32) -> (i32, i32) {
    %c0_i32 = arith.constant 0 : i32
    %c0_i32_0 = arith.constant 0 : i32
    %c0_i32_1 = arith.constant 0 : i32
    return %c0_i32, %c0_i32_0 : i32, i32
  }
  func.func @transform_2(%arg0: i32) -> (i32, i32) {
    %c0_i32 = arith.constant 0 : i32
    %c0_i32_0 = arith.constant 0 : i32
    return %arg0, %c0_i32 : i32, i32
  }
}

</mosaic_0001>

<llo_original>
// kernel: tpu_custom_call.1
$region0: #{tpu_custom_call.1}
  #allocation0 [shape = 'u32[]', space=smem, size = 0x4, offset = 0x4, fixed_abs, tag = 'smem constant byte address 0x4 - core index']
  #allocation1 [shape = 'u32[72,128]{1,0:T(1,128)}', space=vmem, size = 0x9000, scoped, tag = 'internal scratch']
  %s0 = inlined_call_operand.hbm [shape: f32[256,128], index: 0, kind: input, shape index: {}]
  %s1 = inlined_call_operand.hbm [shape: f32[128,128], index: 1, kind: input, shape index: {}]
  %s2 = inlined_call_operand.hbm [shape: f32[256,128], index: 2, kind: output, shape index: {}]
  %s3 = sld [smem:[#allocation0]]
  $region26: #{tpu_custom_call.1} parent=0
    _
  %s5 = ssub.s32 1, %s3
  %s6 = scalar_select 0, %s5, %s3
  $region1: #{tpu_custom_call.1} parent=0
    #allocation2 [shape = 'u8[131072]{0}', space=vmem, size = 0x20000, scoped, tag = 'input window, operand 0, single buffered']
    #allocation3 [shape = 's32[1]{0}', space=sflag, size = 0x4, scoped, tag = 'scoped memory for tpu_custom_call.1']
    #allocation4 [shape = 's32[1]{0}', space=sflag, size = 0x4, scoped, tag = 'scoped memory for tpu_custom_call.1']
    #allocation5 [shape = 'u8[65536]{0}', space=vmem, size = 0x10000, scoped, tag = 'input window, operand 1, single buffered']
    #allocation6 [shape = 's32[1]{0}', space=sflag, size = 0x4, scoped, tag = 'scoped memory for tpu_custom_call.1']
    #allocation7 [shape = 'u8[131072]{0}', space=vmem, size = 0x20000, scoped, tag = 'output window, operand 0, single buffered']
    %7 = vsyncpa [#allocation3], 0
    %8 = vsyncpa [#allocation6], 0
    %9 = vsyncpa [#allocation4], 0
    // Predicated region
    $region2: #{tpu_custom_call.1} parent=1 // pred_check
      _
    $region3: #{tpu_custom_call.1} parent=1 // pred_check_branch
      %11 = sbr.rel (0) target = $region5
    $region4: #{tpu_custom_call.1} parent=1 // pred_region
      %13 = vsyncadd [#allocation3], 0
      %s14 = sshll.u32 %s0, 4
      %s15 = int_to_ptr.hbm [resolvable:$true] %s14
      %s16 = sshll.u32 [#allocation2], 4
      %s17 = int_to_ptr.vmem [resolvable:$true] %s16
      %22 = dma.hbm_to_vmem [thread:$0]  %s15, 4096, %s17, [#allocation3], 128, 128, 8
    $region5: #{tpu_custom_call.1} parent=1 // pred_fallthru
      _
    // Predicated region
    $region6: #{tpu_custom_call.1} parent=1 // pred_check
      _
    $region7: #{tpu_custom_call.1} parent=1 // pred_check_branch
      %24 = sbr.rel (0) target = $region9
    $region8: #{tpu_custom_call.1} parent=1 // pred_region
      %26 = vsyncadd [#allocation6], 0
      %s27 = sshll.u32 %s1, 4
      %s28 = int_to_ptr.hbm [resolvable:$true] %s27
      %s29 = sshll.u32 [#allocation5], 4
      %s30 = int_to_ptr.vmem [resolvable:$true] %s29
      %35 = dma.hbm_to_vmem [thread:$0]  %s28, 2048, %s30, [#allocation6], 128, 128, 8
    $region9: #{tpu_custom_call.1} parent=1 // pred_fallthru
      _
    // Predicated region
    $region10: #{tpu_custom_call.1} parent=1 // pred_check
      _
    $region11: #{tpu_custom_call.1} parent=1 // pred_check_branch
      %37 = sbr.rel (0) target = $region13
    $region12: #{tpu_custom_call.1} parent=1 // pred_region
      %39 = dma.done [#allocation3], 4096
    $region13: #{tpu_custom_call.1} parent=1 // pred_fallthru
      _
    // Predicated region
    $region14: #{tpu_custom_call.1} parent=1 // pred_check
      _
    $region15: #{tpu_custom_call.1} parent=1 // pred_check_branch
      %41 = sbr.rel (0) target = $region17
    $region16: #{tpu_custom_call.1} parent=1 // pred_region
      %43 = dma.done [#allocation6], 2048
    $region17: #{tpu_custom_call.1} parent=1 // pred_fallthru
      _
    %v44 = vld [vmem:[#allocation2] sm:$0xff]
    %v45 = vld [vmem:[#allocation2 + $0x8] sm:$0xff]
    %v46 = vld [vmem:[#allocation2 + $0x10] sm:$0xff]
    %v47 = vld [vmem:[#allocation2 + $0x18] sm:$0xff]
    %v48 = vld [vmem:[#allocation2 + $0x20] sm:$0xff]
    %v49 = vld [vmem:[#allocation2 + $0x28] sm:$0xff]
    %v50 = vld [vmem:[#allocation2 + $0x30] sm:$0xff]
    %v51 = vld [vmem:[#allocation2 + $0x38] sm:$0xff]
    %v52 = vld [vmem:[#allocation2 + $0x40] sm:$0xff]
    %v53 = vld [vmem:[#allocation2 + $0x48] sm:$0xff]
    %v54 = vld [vmem:[#allocation2 + $0x50] sm:$0xff]
    %v55 = vld [vmem:[#allocation2 + $0x58] sm:$0xff]
    %v56 = vld [vmem:[#allocation2 + $0x60] sm:$0xff]
    %v57 = vld [vmem:[#allocation2 + $0x68] sm:$0xff]
    %v58 = vld [vmem:[#allocation2 + $0x70] sm:$0xff]
    %v59 = vld [vmem:[#allocation2 + $0x78] sm:$0xff]
    %v60 = vld [vmem:[#allocation2 + $0x80] sm:$0xff]
    %v61 = vld [vmem:[#allocation2 + $0x88] sm:$0xff]
    %v62 = vld [vmem:[#allocation2 + $0x90] sm:$0xff]
    %v63 = vld [vmem:[#allocation2 + $0x98] sm:$0xff]
    %v64 = vld [vmem:[#allocation2 + $0xa0] sm:$0xff]
    %v65 = vld [vmem:[#allocation2 + $0xa8] sm:$0xff]
    %v66 = vld [vmem:[#allocation2 + $0xb0] sm:$0xff]
    %v67 = vld [vmem:[#allocation2 + $0xb8] sm:$0xff]
    %v68 = vld [vmem:[#allocation2 + $0xc0] sm:$0xff]
    %v69 = vld [vmem:[#allocation2 + $0xc8] sm:$0xff]
    %v70 = vld [vmem:[#allocation2 + $0xd0] sm:$0xff]
    %v71 = vld [vmem:[#allocation2 + $0xd8] sm:$0xff]
    %v72 = vld [vmem:[#allocation2 + $0xe0] sm:$0xff]
    %v73 = vld [vmem:[#allocation2 + $0xe8] sm:$0xff]
    %v74 = vld [vmem:[#allocation2 + $0xf0] sm:$0xff]
    %v75 = vld [vmem:[#allocation2 + $0xf8] sm:$0xff]
    %v76 = vld [vmem:[#allocation5] sm:$0xff]
    %v77 = vld [vmem:[#allocation5 + $0x8] sm:$0xff]
    %v78 = vld [vmem:[#allocation5 + $0x10] sm:$0xff]
    %v79 = vld [vmem:[#allocation5 + $0x18] sm:$0xff]
    %v80 = vld [vmem:[#allocation5 + $0x20] sm:$0xff]
    %v81 = vld [vmem:[#allocation5 + $0x28] sm:$0xff]
    %v82 = vld [vmem:[#allocation5 + $0x30] sm:$0xff]
    %v83 = vld [vmem:[#allocation5 + $0x38] sm:$0xff]
    %v84 = vld [vmem:[#allocation5 + $0x40] sm:$0xff]
    %v85 = vld [vmem:[#allocation5 + $0x48] sm:$0xff]
    %v86 = vld [vmem:[#allocation5 + $0x50] sm:$0xff]
    %v87 = vld [vmem:[#allocation5 + $0x58] sm:$0xff]
    %v88 = vld [vmem:[#allocation5 + $0x60] sm:$0xff]
    %v89 = vld [vmem:[#allocation5 + $0x68] sm:$0xff]
    %v90 = vld [vmem:[#allocation5 + $0x70] sm:$0xff]
    %v91 = vld [vmem:[#allocation5 + $0x78] sm:$0xff]
    %92 = vmatpush.msra.mxu0 %v91
    %93 = vmatpush.msra.mxu0 %v90
    %94 = vmatpush.msra.mxu0 %v89
    %95 = vmatpush.msra.mxu0 %v88
    %96 = vmatpush.msra.mxu0 %v87
    %97 = vmatpush.msra.mxu0 %v86
    %98 = vmatpush.msra.mxu0 %v85
    %99 = vmatpush.msra.mxu0 %v84
    %100 = vmatpush.msra.mxu0 %v83
    %101 = vmatpush.msra.mxu0 %v82
    %102 = vmatpush.msra.mxu0 %v81
    %103 = vmatpush.msra.mxu0 %v80
    %104 = vmatpush.msra.mxu0 %v79
    %105 = vmatpush.msra.mxu0 %v78
    %106 = vmatpush.msra.mxu0 %v77
    %107 = vmatpush.msra.mxu0 %v76
    %108 = vmatmul.f32.gmra.mxu0 %v44
    %v109 = vpop.f32.mrf.mxu0
    %v110 = vadd.f32 0.0, %v109
    %111 = vmatmul.f32.gmra.mxu0 %v45
    %v112 = vpop.f32.mrf.mxu0
    %v113 = vadd.f32 0.0, %v112
    %114 = vmatmul.f32.gmra.mxu0 %v46
    %v115 = vpop.f32.mrf.mxu0
    %v116 = vadd.f32 0.0, %v115
    %117 = vmatmul.f32.gmra.mxu0 %v47
    %v118 = vpop.f32.mrf.mxu0
    %v119 = vadd.f32 0.0, %v118
    %120 = vmatmul.f32.gmra.mxu0 %v48
    %v121 = vpop.f32.mrf.mxu0
    %v122 = vadd.f32 0.0, %v121
    %123 = vmatmul.f32.gmra.mxu0 %v49
    %v124 = vpop.f32.mrf.mxu0
    %v125 = vadd.f32 0.0, %v124
    %126 = vmatmul.f32.gmra.mxu0 %v50
    %v127 = vpop.f32.mrf.mxu0
    %v128 = vadd.f32 0.0, %v127
    %129 = vmatmul.f32.gmra.mxu0 %v51
    %v130 = vpop.f32.mrf.mxu0
    %v131 = vadd.f32 0.0, %v130
    %132 = vmatmul.f32.gmra.mxu0 %v52
    %v133 = vpop.f32.mrf.mxu0
    %v134 = vadd.f32 0.0, %v133
    %135 = vmatmul.f32.gmra.mxu0 %v53
    %v136 = vpop.f32.mrf.mxu0
    %v137 = vadd.f32 0.0, %v136
    %138 = vmatmul.f32.gmra.mxu0 %v54
    %v139 = vpop.f32.mrf.mxu0
    %v140 = vadd.f32 0.0, %v139
    %141 = vmatmul.f32.gmra.mxu0 %v55
    %v142 = vpop.f32.mrf.mxu0
    %v143 = vadd.f32 0.0, %v142
    %144 = vmatmul.f32.gmra.mxu0 %v56
    %v145 = vpop.f32.mrf.mxu0
    %v146 = vadd.f32 0.0, %v145
    %147 = vmatmul.f32.gmra.mxu0 %v57
    %v148 = vpop.f32.mrf.mxu0
    %v149 = vadd.f32 0.0, %v148
    %150 = vmatmul.f32.gmra.mxu0 %v58
    %v151 = vpop.f32.mrf.mxu0
    %v152 = vadd.f32 0.0, %v151
    %153 = vmatmul.f32.gmra.mxu0 %v59
    %v154 = vpop.f32.mrf.mxu0
    %v155 = vadd.f32 0.0, %v154
    %156 = vmatmul.f32.gmra.mxu0 %v60
    %v157 = vpop.f32.mrf.mxu0
    %v158 = vadd.f32 0.0, %v157
    %159 = vmatmul.f32.gmra.mxu0 %v61
    %v160 = vpop.f32.mrf.mxu0
    %v161 = vadd.f32 0.0, %v160
    %162 = vmatmul.f32.gmra.mxu0 %v62
    %v163 = vpop.f32.mrf.mxu0
    %v164 = vadd.f32 0.0, %v163
    %165 = vmatmul.f32.gmra.mxu0 %v63
    %v166 = vpop.f32.mrf.mxu0
    %v167 = vadd.f32 0.0, %v166
    %168 = vmatmul.f32.gmra.mxu0 %v64
    %v169 = vpop.f32.mrf.mxu0
    %v170 = vadd.f32 0.0, %v169
    %171 = vmatmul.f32.gmra.mxu0 %v65
    %v172 = vpop.f32.mrf.mxu0
    %v173 = vadd.f32 0.0, %v172
    %174 = vmatmul.f32.gmra.mxu0 %v66
    %v175 = vpop.f32.mrf.mxu0
    %v176 = vadd.f32 0.0, %v175
    %177 = vmatmul.f32.gmra.mxu0 %v67
    %v178 = vpop.f32.mrf.mxu0
    %v179 = vadd.f32 0.0, %v178
    %180 = vmatmul.f32.gmra.mxu0 %v68
    %v181 = vpop.f32.mrf.mxu0
    %v182 = vadd.f32 0.0, %v181
    %183 = vmatmul.f32.gmra.mxu0 %v69
    %v184 = vpop.f32.mrf.mxu0
    %v185 = vadd.f32 0.0, %v184
    %186 = vmatmul.f32.gmra.mxu0 %v70
    %v187 = vpop.f32.mrf.mxu0
    %v188 = vadd.f32 0.0, %v187
    %189 = vmatmul.f32.gmra.mxu0 %v71
    %v190 = vpop.f32.mrf.mxu0
    %v191 = vadd.f32 0.0, %v190
    %192 = vmatmul.f32.gmra.mxu0 %v72
    %v193 = vpop.f32.mrf.mxu0
    %v194 = vadd.f32 0.0, %v193
    %195 = vmatmul.f32.gmra.mxu0 %v73
    %v196 = vpop.f32.mrf.mxu0
    %v197 = vadd.f32 0.0, %v196
    %198 = vmatmul.f32.gmra.mxu0 %v74
    %v199 = vpop.f32.mrf.mxu0
    %v200 = vadd.f32 0.0, %v199
    %201 = vmatmul.f32.gmra.mxu0 %v75
    %v202 = vpop.f32.mrf.mxu0
    %v203 = vadd.f32 0.0, %v202
    %204 = vdwg.mxu0
    %205 = vst [vmem:[#allocation7] sm:$0xff] %v110
    %206 = vst [vmem:[#allocation7 + $0x8] sm:$0xff] %v113
    %207 = vst [vmem:[#allocation7 + $0x10] sm:$0xff] %v116
    %208 = vst [vmem:[#allocation7 + $0x18] sm:$0xff] %v119
    %209 = vst [vmem:[#allocation7 + $0x20] sm:$0xff] %v122
    %210 = vst [vmem:[#allocation7 + $0x28] sm:$0xff] %v125
    %211 = vst [vmem:[#allocation7 + $0x30] sm:$0xff] %v128
    %212 = vst [vmem:[#allocation7 + $0x38] sm:$0xff] %v131
    %213 = vst [vmem:[#allocation7 + $0x40] sm:$0xff] %v134
    %214 = vst [vmem:[#allocation7 + $0x48] sm:$0xff] %v137
    %215 = vst [vmem:[#allocation7 + $0x50] sm:$0xff] %v140
    %216 = vst [vmem:[#allocation7 + $0x58] sm:$0xff] %v143
    %217 = vst [vmem:[#allocation7 + $0x60] sm:$0xff] %v146
    %218 = vst [vmem:[#allocation7 + $0x68] sm:$0xff] %v149
    %219 = vst [vmem:[#allocation7 + $0x70] sm:$0xff] %v152
    %220 = vst [vmem:[#allocation7 + $0x78] sm:$0xff] %v155
    %221 = vst [vmem:[#allocation7 + $0x80] sm:$0xff] %v158
    %222 = vst [vmem:[#allocation7 + $0x88] sm:$0xff] %v161
    %223 = vst [vmem:[#allocation7 + $0x90] sm:$0xff] %v164
    %224 = vst [vmem:[#allocation7 + $0x98] sm:$0xff] %v167
    %225 = vst [vmem:[#allocation7 + $0xa0] sm:$0xff] %v170
    %226 = vst [vmem:[#allocation7 + $0xa8] sm:$0xff] %v173
    %227 = vst [vmem:[#allocation7 + $0xb0] sm:$0xff] %v176
    %228 = vst [vmem:[#allocation7 + $0xb8] sm:$0xff] %v179
    %229 = vst [vmem:[#allocation7 + $0xc0] sm:$0xff] %v182
    %230 = vst [vmem:[#allocation7 + $0xc8] sm:$0xff] %v185
    %231 = vst [vmem:[#allocation7 + $0xd0] sm:$0xff] %v188
    %232 = vst [vmem:[#allocation7 + $0xd8] sm:$0xff] %v191
    %233 = vst [vmem:[#allocation7 + $0xe0] sm:$0xff] %v194
    %234 = vst [vmem:[#allocation7 + $0xe8] sm:$0xff] %v197
    %235 = vst [vmem:[#allocation7 + $0xf0] sm:$0xff] %v200
    %236 = vst [vmem:[#allocation7 + $0xf8] sm:$0xff] %v203
    // Predicated region
    $region18: #{tpu_custom_call.1} parent=1 // pred_check
      _
    $region19: #{tpu_custom_call.1} parent=1 // pred_check_branch
      %238 = sbr.rel (0) target = $region21
    $region20: #{tpu_custom_call.1} parent=1 // pred_region
      %240 = vsyncadd [#allocation4], 0
      %s241 = sshll.u32 [#allocation7], 4
      %s242 = int_to_ptr.vmem [resolvable:$true] %s241
      %s243 = sshll.u32 %s2, 4
      %s244 = int_to_ptr.hbm [resolvable:$true] %s243
      %249 = dma.vmem_to_hbm [thread:$0]  %s242, 4096, %s244, [#allocation4], 128, 128, 8
    $region21: #{tpu_custom_call.1} parent=1 // pred_fallthru
      _
    // Predicated region
    $region22: #{tpu_custom_call.1} parent=1 // pred_check
      _
    $region23: #{tpu_custom_call.1} parent=1 // pred_check_branch
      %251 = sbr.rel (0) target = $region25
    $region24: #{tpu_custom_call.1} parent=1 // pred_region
      %253 = dma.done [#allocation4], 4096
    $region25: #{tpu_custom_call.1} parent=1 // pred_fallthru
      _
    %254 = vsyncpa [#allocation3], 1
    %255 = vsyncpa [#allocation6], 1
    %256 = vsyncpa [#allocation4], 1

</llo_original>
